<compile_context>
chip_gen: v5e
topology: v5e:2x2
jax: 0.10.0
libtpu: 0.0.40
codegen_flags: <defaults>
</compile_context>

<pallas_src>
import math

import jax
import jax.numpy as jnp
from jax.experimental import pallas as pl
from jax.experimental.pallas import tpu as pltpu

# Module constants (synthetic, deterministic). The source file defines D = 0.001
# and grid-spacing squared constants dx2, dy2 as module globals.
D = 0.001
DX = 1.0
DY = 1.0
DX2 = DX * DX
DY2 = DY * DY

# Strength-reduced stencil coefficients, folded at trace time.
CX = D / DX2
CY = D / DY2
C0 = 2.0 * (CX + CY)

_MAX_ROW_BLOCK = 512          # target >= 512 sublanes per tile when possible
_VMEM_TILE_BUDGET = 8 << 20   # stay well under the 16 MiB v5e scoped default


def _pick_row_block(nr, ny, itemsize):
    """Pick an output-row block size: multiple of 8 that divides nr (or nr)."""
    cap = max(8, _VMEM_TILE_BUDGET // (3 * max(ny, 1) * itemsize))
    cap = min(cap, _MAX_ROW_BLOCK)
    if nr <= cap:
        return nr
    start = cap - (cap % 8)
    for tr in range(start, 7, -8):
        if nr % tr == 0:
            return tr
    return nr  # no nice divisor: fall back to a single full-slab row block


def _make_kernel(tr, ny):
    """Kernel over one (species*batch slab, row-block) grid cell."""

    def kernel(x_hbm, o_ref, buf):
        b = pl.program_id(0)          # which [nx, ny] slab (species*batch)
        i = pl.program_id(1)          # which row block
        row0 = i * tr
        if tr % 8 == 0:
            row0 = pl.multiple_of(row0, 8)

        # Haloed row window: tr output rows need tr + 2 input rows.
        pltpu.sync_copy(x_hbm.at[b, pl.ds(row0, tr + 2), :], buf)

        a = buf[...].astype(jnp.float32)      # [tr + 2, ny]
        center = a[1:-1, :]                   # input row r + 1
        north = a[2:, :]                      # input row r + 2
        south = a[:-2, :]                     # input row r
        # +/-1 column neighbours via lane rotation (XLU).  Edge lanes carry
        # wrap-around values; the wrapper slices the column interior.
        east = pltpu.roll(center, ny - 1, 1)  # col c+1 -> c
        west = pltpu.roll(center, 1, 1)       # col c-1 -> c

        lap = CX * (north + south) + CY * (east + west) - C0 * center
        o_ref[...] = lap.astype(o_ref.dtype)  # full-ny lane-dense store

    return kernel


def pure_ode_forward(t, y, *, row_block=None):
    """Pallas implementation of pureODE.forward.

    Args:
      t: unused scalar time (API parity with the PyTorch module).
      y: [..., nx, ny, 2] float array.
      row_block: optional forced output-row block size (must divide nx - 2 and
        be a multiple of 8 unless it equals nx - 2).
    Returns:
      [..., nx-2, ny-2, 2] array of the same dtype.
    """
    del t
    assert y.ndim >= 3 and y.shape[-1] == 2
    *lead, nx, ny, ns = y.shape
    bsz = math.prod(lead) if lead else 1
    nr = nx - 2
    nc = ny - 2
    assert nr >= 1 and nc >= 1

    # One transpose so u/v become contiguous [B*2, nx, ny] slabs (no stride-2
    # gathers, no interleaving stack around the kernel).
    x = jnp.moveaxis(y.reshape(bsz, nx, ny, ns), -1, 1).reshape(bsz * ns, nx, ny)

    itemsize = jnp.dtype(y.dtype).itemsize
    tr = _pick_row_block(nr, ny, itemsize) if row_block is None else int(row_block)
    assert nr % tr == 0 and (tr % 8 == 0 or tr == nr), (nr, tr)
    nb = nr // tr

    out = pl.pallas_call(
        _make_kernel(tr, ny),
        out_shape=jax.ShapeDtypeStruct((bsz * ns, nr, ny), y.dtype),
        grid=(bsz * ns, nb),
        in_specs=[pl.BlockSpec(memory_space=pl.ANY)],   # raw HBM ref, manual DMA
        out_specs=pl.BlockSpec((None, tr, ny), lambda s, i: (s, i, 0)),
        scratch_shapes=[pltpu.VMEM((tr + 2, ny), y.dtype)],
        compiler_params=pltpu.CompilerParams(
            dimension_semantics=("parallel", "parallel"),
        ),
    )(x)

    # Slice the column interior outside the kernel (keeps kernel stores
    # lane-dense), then restore the [..., 2] species layout with one transpose.
    out = out[:, :, 1:ny - 1]
    out = jnp.moveaxis(out.reshape(bsz, ns, nr, nc), 1, -1)
    return out.reshape(*lead, nr, nc, ns)


def _reference(t, y):
    """Pure-JAX reference mirroring the PyTorch forward exactly."""
    del t
    u = y[..., 0]
    v = y[..., 1]

    def lap(a):
        c = a[..., 1:-1, 1:-1]
        return D * (
            (a[..., 2:, 1:-1] - 2 * c + a[..., :-2, 1:-1]) / DX2
            + (a[..., 1:-1, 2:] - 2 * c + a[..., 1:-1, :-2]) / DY2
        )

    return jnp.stack([lap(u), lap(v)], axis=-1)


if __name__ == "__main__":
    key = jax.random.PRNGKey(0)
    t = jnp.float32(0.0)

    # Small demo shape: batch=2, 16 x 128 spatial grid, 2 species.
    B, nx, ny = 2, 16, 128
    y = jax.random.normal(key, (B, nx, ny, 2), dtype=jnp.float32)

    out = jax.block_until_ready(pure_ode_forward(t, y))
    ref = _reference(t, y)
    assert out.shape == (B, nx - 2, ny - 2, 2), out.shape
    assert jnp.allclose(out, ref, atol=1e-6, rtol=1e-5), "mismatch vs reference"

    # Exercise the multi-row-block (haloed) tiling path with a forced small block.
    y2 = jax.random.normal(jax.random.PRNGKey(1), (B, 34, ny, 2), dtype=jnp.float32)
    out2 = jax.block_until_ready(pure_ode_forward(t, y2, row_block=8))
    ref2 = _reference(t, y2)
    assert out2.shape == (B, 32, ny - 2, 2), out2.shape
    assert jnp.allclose(out2, ref2, atol=1e-6, rtol=1e-5), "mismatch vs reference (tiled)"

    print("KERNEL_OK")
</pallas_src>

<mosaic_0001>
module attributes {stable_mosaic.version = 11 : i64} {
  func.func @kernel(%arg0: i32, %arg1: i32, %arg2: memref<4x16x128xf32, #tpu.memory_space<any>>, %arg3: memref<1x14x128xf32, #tpu.memory_space<vmem>>, %arg4: memref<16x128xf32, #tpu.memory_space<vmem>>) attributes {dimension_semantics = [#tpu.dimension_semantics<parallel>, #tpu.dimension_semantics<parallel>], iteration_bounds = array<i64: 4, 1>, scalar_prefetch = 0 : i64, scratch_operands = 1 : i64, tpu.core_type = #tpu.core_type<tc>, window_params = [{}, {transform_indices = @transform_1, window_bounds = array<i64: 1, 14, 128>}]} {
    %c14_i32 = arith.constant 14 : i32
    %0 = arith.muli %arg1, %c14_i32 : i32
    "tpu.region"() ({
      %20 = tpu.sem_alloc : memref<!tpu.dma_semaphore, #tpu.memory_space<semaphore_mem>>
      %c0_i32 = arith.constant 0 : i32
      %21 = tpu.memref_slice %arg2[%arg0, %0, %c0_i32] : memref<4x16x128xf32, #tpu.memory_space<any>> -> memref<1x16x128xf32, #tpu.memory_space<any>>
      %22 = tpu.memref_squeeze %21 : memref<1x16x128xf32, #tpu.memory_space<any>> -> memref<16x128xf32, #tpu.memory_space<any>>
      tpu.enqueue_dma source(%22 : memref<16x128xf32, #tpu.memory_space<any>>) target(%arg4 : memref<16x128xf32, #tpu.memory_space<vmem>>) target_semaphore(%20 : memref<!tpu.dma_semaphore, #tpu.memory_space<semaphore_mem>>)
      %c0_i32_6 = arith.constant 0 : i32
      %23 = tpu.memref_slice %arg2[%arg0, %0, %c0_i32_6] : memref<4x16x128xf32, #tpu.memory_space<any>> -> memref<1x16x128xf32, #tpu.memory_space<any>>
      %24 = tpu.memref_squeeze %23 : memref<1x16x128xf32, #tpu.memory_space<any>> -> memref<16x128xf32, #tpu.memory_space<any>>
      tpu.wait_dma2 semaphore(%20 : memref<!tpu.dma_semaphore, #tpu.memory_space<semaphore_mem>>) src(%24 : memref<16x128xf32, #tpu.memory_space<any>>) dst(%arg4 : memref<16x128xf32, #tpu.memory_space<vmem>>)
      tpu.yield
    }) : () -> ()
    %c0 = arith.constant 0 : index
    %c0_0 = arith.constant 0 : index
    %1 = vector.load %arg4[%c0, %c0_0] : memref<16x128xf32, #tpu.memory_space<vmem>>, vector<16x128xf32>
    %2 = vector.extract_strided_slice %1 {offsets = [1, 0], sizes = [14, 128], strides = [1, 1]} : vector<16x128xf32> to vector<14x128xf32>
    %3 = vector.extract_strided_slice %1 {offsets = [2, 0], sizes = [14, 128], strides = [1, 1]} : vector<16x128xf32> to vector<14x128xf32>
    %4 = vector.extract_strided_slice %1 {offsets = [0, 0], sizes = [14, 128], strides = [1, 1]} : vector<16x128xf32> to vector<14x128xf32>
    %c127_i32 = arith.constant 127 : i32
    %5 = tpu.dynamic_rotate %2 by %c127_i32 dim 1 : vector<14x128xf32>, i32 -> vector<14x128xf32>
    %c1_i32 = arith.constant 1 : i32
    %6 = tpu.dynamic_rotate %2 by %c1_i32 dim 1 : vector<14x128xf32>, i32 -> vector<14x128xf32>
    %7 = arith.addf %3, %4 : vector<14x128xf32>
    %cst = arith.constant 1.000000e-03 : f32
    %8 = vector.broadcast %cst : f32 to vector<14x128xf32>
    %9 = arith.mulf %8, %7 : vector<14x128xf32>
    %10 = arith.addf %5, %6 : vector<14x128xf32>
    %cst_1 = arith.constant 1.000000e-03 : f32
    %11 = vector.broadcast %cst_1 : f32 to vector<14x128xf32>
    %12 = arith.mulf %11, %10 : vector<14x128xf32>
    %13 = arith.addf %9, %12 : vector<14x128xf32>
    %cst_2 = arith.constant 4.000000e-03 : f32
    %14 = vector.broadcast %cst_2 : f32 to vector<14x128xf32>
    %15 = arith.mulf %14, %2 : vector<14x128xf32>
    %16 = arith.subf %13, %15 : vector<14x128xf32>
    %c0_3 = arith.constant 0 : index
    %c0_4 = arith.constant 0 : index
    %c0_5 = arith.constant 0 : index
    %17 = vector.load %arg3[%c0_3, %c0_4, %c0_5] : memref<1x14x128xf32, #tpu.memory_space<vmem>>, vector<1x14x128xf32>
    %18 = vector.shape_cast %17 : vector<1x14x128xf32> to vector<14x128xf32>
    %19 = vector.shape_cast %16 : vector<14x128xf32> to vector<1x14x128xf32>
    tpu.vector_store %arg3[%c0_3, %c0_4, %c0_5], %19 {strides = array<i32>} : memref<1x14x128xf32, #tpu.memory_space<vmem>>, vector<1x14x128xf32>,
    return
  }
  func.func @transform_1(%arg0: i32, %arg1: i32) -> (i32, i32, i32) {
    %c0_i32 = arith.constant 0 : i32
    %c0_i32_0 = arith.constant 0 : i32
    return %arg0, %arg1, %c0_i32 : i32, i32, i32
  }
}

</mosaic_0001>

<llo_original>
// kernel: tpu_custom_call.1
$region0: #{tpu_custom_call.1}
  #allocation0 [shape = 'u32[]', space=smem, size = 0x4, offset = 0x4, fixed_abs, tag = 'smem constant byte address 0x4 - core index']
  #allocation1 [shape = 'u32[72,128]{1,0:T(1,128)}', space=vmem, size = 0x9000, scoped, tag = 'internal scratch']
  #allocation2 [shape = 'f32[16,128]{1,0:T(8,128)}', space=vmem, size = 0x2000, scoped, tag = 'scratch operand']
  #allocation4 [shape = 's32[]', space=sflag, size = 0x4, offset = 0, fixed_abs, tag = 'sflag constant byte address 0x0 - dummy sync flag']
  #allocation5 [shape = 's32[]', space=sflag, size = 0x4, offset = 0, fixed_abs, tag = 'sflag constant byte address 0x0 - dummy sync flag']
  #allocation6 [shape = 'u32[]', space=smem, size = 0x4, offset = 0x44, fixed_abs, tag = 'smem constant byte address 0x44 - assertion arg 0']
  #allocation7 [shape = 'u32[]', space=smem, size = 0x4, offset = 0x48, fixed_abs, tag = 'smem constant byte address 0x48 - assertion arg 1']
  %s0 = inlined_call_operand.hbm [shape: f32[4,16,128], index: 0, kind: input, shape index: {}]
  %s1 = inlined_call_operand.vmem [shape: f32[4,14,128], index: 1, kind: output, shape index: {}]
  %s2 = sld [smem:[#allocation0]]
  $region30: #{tpu_custom_call.1} parent=0
    _
  %s4 = ssub.s32 1, %s2
  %s5 = scalar_select 0, %s4, %s2
  loop: start=0, step=1, limit=5
  $region2: #{tpu_custom_call.1} parent=0 // loop_pre_header
    _
  $region3: #{tpu_custom_call.1} parent=0 // loop_header
    %s7 = sphi 0, %s11
    %p8 = scmp.ge.s32.totalorder %s7, 5
    %s13 = sphi 0, %s23
    %s14 = sphi 0, %s19
    %s15 = sphi 0, %s13
    %s16 = sphi 0, %s14
    %s28 = sphi 0, %s30
    %s31 = sphi 0, %s28
    %s41 = sphi 0, %s31
  $region4: #{tpu_custom_call.1} parent=0 // loop_header_branch
    %10 = sbr.rel (%p8) target = $region8
  $region5: #{tpu_custom_call.1} parent=0 // loop_body
    %s12 = ssub.s32 %s7, 1
    %s17 = sadd.s32 1, %s14
    %p18 = scmp.ge.s32.totalorder %s17, 1
    %s19 = scalar_select %p18, 0, %s17
    %s20 = sadd.s32 1, %s13
    %s21 = scalar_select %p18, %s20, %s13
    %p22 = scmp.ge.s32.totalorder %s21, 4
    %s23 = scalar_select %p22, 0, %s21
    %s24 = ssub.s32 %s13, %s23
    %s25 = ssub.s32 %s14, %s19
    %s26 = sor.u32 %s24, %s25
    %p27 = scmp.eq.s32.totalorder %s26, 0
    %s29 = sadd.s32 %s28, 1
    %s30 = scalar_select %p27, %s28, %s29
    %p32 = pneg %p27
    %p33 = scmp.eq.s32.totalorder %s7, 3
    %p34 = por %p32, %p33
    %p35 = scmp.ne.s32.totalorder %s28, %s31
    %p36 = scmp.eq.s32.totalorder %s7, 0
    %p37 = por %p35, %p36
    %p38 = scmp.ne.s32.totalorder %s28, %s31
    %p39 = scmp.eq.s32.totalorder %s12, 3
    %p40 = por %p38, %p39
    %p42 = scmp.ne.s32.totalorder %s31, %s41
    %p43 = scmp.eq.s32.totalorder %s12, 0
    %p44 = por %p42, %p43
    %p45 = scmp.lt.s32.totalorder %s7, 4
    // Predicated region
    $region9: #{tpu_custom_call.1} parent=5 // pred_check
      %p46 = pneg %p45
    $region10: #{tpu_custom_call.1} parent=5 // pred_check_branch
      %48 = sbr.rel (%p46) target = $region12
    $region11: #{tpu_custom_call.1} parent=5 // pred_region
      %p49 = pneg %p37
      %p50 = pneg %p34
      %s51 = smul.u32 2, %s14
      %p52 = scmp.lt.s32.totalorder %s13, 3
      %s53 = scalar_select %p52, %s13, 3
      %p54 = scmp.lt.s32.totalorder %s51, 1
      %s55 = scalar_select %p54, %s51, 1
      %s56 = smul.addr %s53, 2
      %s57 = sadd.s32 %s55, %s56
      %s58 = smul.addr %s57, 8
      %s59 = scalar_lea.vmem %s1, %s58
      %s60 = smul.u32 2, %s14
      %p61 = scmp.lt.s32.totalorder %s13, 3
      %s62 = scalar_select %p61, %s13, 3
      %p63 = scmp.lt.s32.totalorder %s60, 1
      %s64 = scalar_select %p63, %s60, 1
      %s65 = smul.addr %s62, 2
      %s66 = sadd.s32 %s64, %s65
      %s67 = smul.addr %s66, 8
      %s68 = scalar_lea.vmem %s1, %s67
      %s69 = smul.u32 2, %s14
      %s70 = smul.u32 %s14, 14
      $region13: #{tpu_custom_call.1} parent=11
        #allocation3 [shape = 's32[1]{0}', space=sflag, size = 0x4, scoped, tag = 'scoped memory for tpu_custom_call.1']
        %s71 = smul.u32 %s13, 16
        %s72 = sadd.s32 %s70, %s71
        %s73 = scalar_lea.hbm %s0, %s72
        // Predicated region
        $region14: #{tpu_custom_call.1} parent=13 // pred_check
          _
        $region15: #{tpu_custom_call.1} parent=13 // pred_check_branch
          %75 = sbr.rel target = $region17
        $region16: #{tpu_custom_call.1} parent=13 // pred_region
          %76 = sst [smem:[#allocation6]] [#allocation5]
          %77 = sst [smem:[#allocation7]] [#allocation4]
        $region17: #{tpu_custom_call.1} parent=13 // pred_fallthru
          _
        %79 = shalt.err (0)
        %s81 = sshll.u32 %s73, 4
        %s82 = int_to_ptr.hbm [resolvable:$true] %s81
        %s83 = sshll.u32 [#allocation2], 4
        %s84 = int_to_ptr.vmem [resolvable:$true] %s83
        %86 = dma.hbm_to_vmem [thread:$0]  %s82, 256, %s84, [#allocation3]
        %s87 = smul.u32 16, 1
        %s88 = sshll.u32 %s87, 4
        %89 = dma.done [#allocation3], %s88
      %v90 = vld [vmem:[#allocation2] sm:$0xff]
      %v91 = vld [vmem:[#allocation2 + $0x8] sm:$0xff]
      %vm94 = vcmask 1046528
      %v95 = vrot.slane %v90, 1
      %v96 = vrot.slane %v91, 1
      %v97 = vsel %vm94, %v95, %v96
      %100 = vrot.lane.b32.xlu0 %v97, 127
      %v101 = vpop.permute.xlu0 %100
      %102 = vrot.lane.b32.xlu0 %v96, 127
      %v103 = vpop.permute.xlu0 %102
      %104 = vrot.lane.b32.xlu0 %v97, 1
      %v105 = vpop.permute.xlu0 %104
      %106 = vrot.lane.b32.xlu0 %v96, 1
      %v107 = vpop.permute.xlu0 %106
      %vm108 = vcmask 1041408
      %v109 = vrot.slane %v90, 6
      %v110 = vrot.slane %v91, 6
      %v111 = vsel %vm108, %v109, %v110
      %v114 = vadd.f32 %v90, %v109
      %v115 = vadd.f32 %v91, %v111
      %v116 = vmul.f32 %v114, 0.001
      %v117 = vmul.f32 %v115, 0.001
      %v118 = vadd.f32 %v101, %v105
      %v119 = vadd.f32 %v103, %v107
      %v120 = vmul.f32 %v118, 0.001
      %v121 = vmul.f32 %v119, 0.001
      %v124 = vrot.slane %v120, 6
      %v125 = vrot.slane %v121, 6
      %v126 = vsel %vm108, %v124, %v125
      %v129 = vadd.f32 %v116, %v124
      %v130 = vadd.f32 %v117, %v126
      %v131 = vmul.f32 %v90, 0.004
      %v132 = vmul.f32 %v91, 0.004
      %vm135 = vcmask 1040384
      %v136 = vrot.slane %v131, 7
      %v137 = vrot.slane %v132, 7
      %v138 = vsel %vm135, %v136, %v137
      %v141 = vsub.f32 %v129, %v136
      %v142 = vsub.f32 %v130, %v138
      %143 = vst [vmem:[%s68 - $0x2] sm:$0xfc] %v141
      %144 = vst [vmem:[%s68 + $0x6] sm:$0xff] %v142
      %s145 = smul.u32 2, %s14
      %p146 = scmp.lt.s32.totalorder %s13, 3
      %s147 = scalar_select %p146, %s13, 3
      %p148 = scmp.lt.s32.totalorder %s145, 1
      %s149 = scalar_select %p148, %s145, 1
      %s150 = smul.addr %s147, 2
      %s151 = sadd.s32 %s149, %s150
      %s152 = smul.addr %s151, 8
      %s153 = scalar_lea.vmem %s1, %s152
      // Predicated region
      $region18: #{tpu_custom_call.1} parent=11 // pred_check
        %p154 = pneg %p34
      $region19: #{tpu_custom_call.1} parent=11 // pred_check_branch
        %156 = sbr.rel (%p154) target = $region21
      $region20: #{tpu_custom_call.1} parent=11 // pred_region
        %s157 = smul.u32 2, %s14
      $region21: #{tpu_custom_call.1} parent=11 // pred_fallthru
        _
    $region12: #{tpu_custom_call.1} parent=5 // pred_fallthru
      _
    %p158 = scmp.le.s32.totalorder 1, %s7
    // Predicated region
    $region22: #{tpu_custom_call.1} parent=5 // pred_check
      %p159 = pneg %p158
    $region23: #{tpu_custom_call.1} parent=5 // pred_check_branch
      %161 = sbr.rel (%p159) target = $region25
    $region24: #{tpu_custom_call.1} parent=5 // pred_region
      %s162 = ssub.s32 %s7, 1
      // Predicated region
      $region26: #{tpu_custom_call.1} parent=24 // pred_check
        %p163 = pneg %p40
      $region27: #{tpu_custom_call.1} parent=24 // pred_check_branch
        %165 = sbr.rel (%p163) target = $region29
      $region28: #{tpu_custom_call.1} parent=24 // pred_region
        %s166 = smul.u32 2, %s16
        %p167 = scmp.lt.s32.totalorder %s15, 3
        %s168 = scalar_select %p167, %s15, 3
        %p169 = scmp.lt.s32.totalorder %s166, 1
        %s170 = scalar_select %p169, %s166, 1
        %s171 = smul.addr %s168, 2
        %s172 = sadd.s32 %s170, %s171
        %s173 = smul.addr %s172, 8
        %s174 = scalar_lea.vmem %s1, %s173
      $region29: #{tpu_custom_call.1} parent=24 // pred_fallthru
        _
    $region25: #{tpu_custom_call.1} parent=5 // pred_fallthru
      _
  $region6: #{tpu_custom_call.1} parent=0 // loop_footer
    %s11 = sadd.s32 1, %s7
  $region7: #{tpu_custom_call.1} parent=0 // loop_footer_branch
    %6 = sbr.rel target = $region3
  $region8: #{tpu_custom_call.1} parent=0 // loop_exit
    _

</llo_original>
